<compile_context>
chip_gen: v5e
topology: v5e:2x2
jax: 0.10.0
libtpu: 0.0.40
codegen_flags: <defaults>
</compile_context>

<pallas_src>
import jax
import jax.numpy as jnp
from jax.experimental import pallas as pl
from jax.experimental.pallas import tpu as pltpu


_ROW_UNROLL = 8                       # static unroll factor (= sublane count)
_SMALL_TABLE_BYTES = 8 * 1024 * 1024  # VMEM-resident-table threshold (v7x safe)
_OUT_BLOCK_BYTES = 4 * 1024 * 1024    # per-buffer output block budget
_VMEM_LIMIT = 32 * 1024 * 1024


def _round_up(x: int, m: int) -> int:
    return ((x + m - 1) // m) * m


# --------------------------------------------------------------------------
# Path 1: small table, VMEM-resident W, exact local row copies.
# --------------------------------------------------------------------------
def _embed_small_table_kernel(ids_ref, w_ref, out_ref):
    """ids_ref: SMEM (n_pad,) int32 (scalar-prefetched, clamped)
    w_ref:   VMEM (V, D) -- whole table, resident across the grid
    out_ref: VMEM (tile, D) -- output block for this grid step
    """
    tile = out_ref.shape[0]
    base = pl.multiple_of(pl.program_id(0) * tile, tile)

    @pl.loop(0, tile // _ROW_UNROLL)
    def _rows(c):
        row0 = pl.multiple_of(c * _ROW_UNROLL, _ROW_UNROLL)
        for u in range(_ROW_UNROLL):                 # static partial unroll
            row = row0 + u
            tok = ids_ref[base + row]
            out_ref[pl.ds(row, 1), :] = w_ref[pl.ds(tok, 1), :]


def _embed_small_table(ids, W, tile):
    V, D = W.shape
    n_pad = ids.shape[0]
    itemsize = jnp.dtype(W.dtype).itemsize
    return pl.pallas_call(
        _embed_small_table_kernel,
        out_shape=jax.ShapeDtypeStruct((n_pad, D), W.dtype),
        grid_spec=pltpu.PrefetchScalarGridSpec(
            num_scalar_prefetch=1,                       # ids -> SMEM
            grid=(n_pad // tile,),
            # Constant index_map -> table is fetched from HBM once, then
            # stays resident in VMEM for every grid step.
            in_specs=[pl.BlockSpec((V, D), lambda i, ids: (0, 0))],
            out_specs=pl.BlockSpec((tile, D), lambda i, ids: (i, 0)),
        ),
        compiler_params=pltpu.CompilerParams(
            dimension_semantics=("parallel",),
            vmem_limit_bytes=_VMEM_LIMIT,
        ),
        cost_estimate=pl.CostEstimate(
            flops=0,
            transcendentals=0,
            bytes_accessed=V * D * itemsize + n_pad * D * itemsize + 4 * n_pad,
        ),
    )(ids, W)


# --------------------------------------------------------------------------
# Path 2: large table stays in HBM, per-row DMA gather into the output block.
# --------------------------------------------------------------------------
def _embed_hbm_gather_kernel(ids_ref, w_hbm_ref, out_ref, copy_sem):
    """ids_ref:   SMEM (n_pad,) int32
    w_hbm_ref: HBM  (V, Dw)  -- never copied wholesale into VMEM
    out_ref:   VMEM (tile, Dw)
    copy_sem:  single shared DMA semaphore (one per kernel, not per row)
    """
    tile = out_ref.shape[0]
    base = pl.multiple_of(pl.program_id(0) * tile, tile)

    def row_copy(tok, row):
        return pltpu.make_async_copy(
            w_hbm_ref.at[pl.ds(tok, 1), :],
            out_ref.at[pl.ds(row, 1), :],
            copy_sem,
        )

    # Issue phase: all row gathers queued against one shared semaphore so the
    # DMA engine pipelines them; 8-way unroll so id loads / address math
    # co-issue with descriptor pushes.
    @pl.loop(0, tile // _ROW_UNROLL)
    def _issue(c):
        row0 = pl.multiple_of(c * _ROW_UNROLL, _ROW_UNROLL)
        for u in range(_ROW_UNROLL):
            row = row0 + u
            row_copy(ids_ref[base + row], row).start()

    # Wait phase: each wait consumes exactly one row-copy's worth of the
    # shared semaphore (geometry identical to every issued copy), so waiting
    # tile times guarantees all gathers landed before the block writes back.
    @pl.loop(0, tile // _ROW_UNROLL)
    def _wait(c):
        row0 = pl.multiple_of(c * _ROW_UNROLL, _ROW_UNROLL)
        for u in range(_ROW_UNROLL):
            row_copy(0, row0 + u).wait()


def _embed_hbm_gather(ids, W, tile):
    V, D = W.shape
    n_pad = ids.shape[0]
    itemsize = jnp.dtype(W.dtype).itemsize

    # Sub-32-bit tables: bitcast rows to uint32 so every row DMA / store is
    # 32-bit dense (avoids strided partial transfers into packed sublanes).
    packed = itemsize < 4 and (D * itemsize) % 4 == 0
    if packed:
        per = 4 // itemsize
        Dk = D // per
        W_k = jax.lax.bitcast_convert_type(W.reshape(V, Dk, per), jnp.uint32)
    else:
        Dk, W_k = D, W
    itemsize_k = jnp.dtype(W_k.dtype).itemsize

    out = pl.pallas_call(
        _embed_hbm_gather_kernel,
        out_shape=jax.ShapeDtypeStruct((n_pad, Dk), W_k.dtype),
        grid_spec=pltpu.PrefetchScalarGridSpec(
            num_scalar_prefetch=1,                          # ids -> SMEM
            grid=(n_pad // tile,),
            in_specs=[pl.BlockSpec(memory_space=pl.ANY)],   # W stays in HBM
            out_specs=pl.BlockSpec((tile, Dk), lambda i, ids: (i, 0)),
            scratch_shapes=[pltpu.SemaphoreType.DMA(())],   # one shared sem
        ),
        compiler_params=pltpu.CompilerParams(
            dimension_semantics=("parallel",),
            vmem_limit_bytes=_VMEM_LIMIT,
        ),
        cost_estimate=pl.CostEstimate(
            flops=0,
            transcendentals=0,
            bytes_accessed=2 * n_pad * Dk * itemsize_k + 4 * n_pad,
        ),
    )(ids, W_k)

    if packed:
        out = jax.lax.bitcast_convert_type(out, W.dtype).reshape(n_pad, D)
    return out


# --------------------------------------------------------------------------
# Public forward: W[token_id] -> (batch, seq, dim)
# --------------------------------------------------------------------------
def embedding_forward(token_id: jax.Array, W: jax.Array, tile_n: int = 512) -> jax.Array:
    B, S = token_id.shape
    V, D = W.shape
    N = B * S
    itemsize = jnp.dtype(W.dtype).itemsize

    # Tile selection: big enough to amortize the ~0.35us/step grid overhead,
    # capped so the double-buffered output block stays within a conservative
    # VMEM budget (v7x only has 64 MiB physical).
    row_bytes = max(1, D * itemsize)
    tile = min(int(tile_n), max(_ROW_UNROLL, _OUT_BLOCK_BYTES // row_bytes))
    tile = min(tile, _round_up(N, _ROW_UNROLL))
    tile = max(_ROW_UNROLL, (tile // _ROW_UNROLL) * _ROW_UNROLL)
    n_pad = _round_up(N, tile)

    # ids -> int32, clamped to [0, V). Manual DMAs / dynamic slices have no
    # runtime bounds check (PyTorch would raise); padded rows gather row 0.
    ids = jnp.clip(token_id.reshape(N).astype(jnp.int32), 0, V - 1)
    ids = jnp.pad(ids, (0, n_pad - N))

    if V * D * itemsize <= _SMALL_TABLE_BYTES:
        out_flat = _embed_small_table(ids, W, tile)
    else:
        out_flat = _embed_hbm_gather(ids, W, tile)

    return out_flat[:N].reshape(B, S, D)


if __name__ == "__main__":
    # Small, deterministic config consistent with the module.
    num_embeddings = 64     # vocab size
    embedding_dim = 128     # embedding dim (lane-dense)
    batch, seq = 2, 8

    key = jax.random.PRNGKey(0)
    k_w, k_ids = jax.random.split(key)

    # nn.init.trunc_normal_(W, mean=0, std=1, a=-3, b=3)
    W = jax.random.truncated_normal(
        k_w, -3.0, 3.0, (num_embeddings, embedding_dim), dtype=jnp.float32
    )
    token_id = jax.random.randint(
        k_ids, (batch, seq), minval=0, maxval=num_embeddings, dtype=jnp.int32
    )

    out = jax.block_until_ready(embedding_forward(token_id, W))

    # Reference: plain-JAX gather (== PyTorch W[token_id]); must be bit-exact.
    ref = W[token_id]
    assert out.shape == (batch, seq, embedding_dim), out.shape
    assert out.dtype == W.dtype
    assert jnp.array_equal(out, ref), "Pallas embedding mismatch vs reference gather"

    print("KERNEL_OK")
</pallas_src>

<mosaic_0001>
module attributes {stable_mosaic.version = 11 : i64} {
  func.func @_embed_small_table_kernel(%arg0: i32, %arg1: memref<16xi32, #tpu.memory_space<smem>>, %arg2: memref<64x128xf32, #tpu.memory_space<vmem>>, %arg3: memref<16x128xf32, #tpu.memory_space<vmem>>) attributes {dimension_semantics = [#tpu.dimension_semantics<parallel>], iteration_bounds = array<i64: 1>, scalar_prefetch = 1 : i64, scratch_operands = 0 : i64, tpu.core_type = #tpu.core_type<tc>, window_params = [{pipeline_mode = #tpu.pipeline_mode<synchronous>, transform_indices = @transform_0, window_bounds = array<i64: 64, 128>}, {transform_indices = @transform_1, window_bounds = array<i64: 16, 128>}]} {
    %c16_i32 = arith.constant 16 : i32
    %0 = arith.muli %arg0, %c16_i32 : i32
    %1 = tpu.assume_multiple %0, 16 : i32
    %c0_i32 = arith.constant 0 : i32
    %c2_i32 = arith.constant 2 : i32
    %2 = arith.addi %c0_i32, %c2_i32 : i32
    %c1_i32 = arith.constant 1 : i32
    scf.for %arg4 = %c0_i32 to %2 step %c1_i32  : i32 {
      %c1_i32_1 = arith.constant 1 : i32
      %3 = arith.muli %arg4, %c1_i32_1 : i32
      %c0_i32_2 = arith.constant 0 : i32
      %4 = arith.addi %c0_i32_2, %3 : i32
      %c8_i32 = arith.constant 8 : i32
      %5 = arith.muli %4, %c8_i32 : i32
      %6 = tpu.assume_multiple %5, 8 : i32
      %c0_i32_3 = arith.constant 0 : i32
      %7 = arith.addi %6, %c0_i32_3 : i32
      %8 = arith.addi %1, %7 : i32
      %9 = arith.index_cast %8 : i32 to index
      %10 = memref.load %arg1[%9] : memref<16xi32, #tpu.memory_space<smem>>
      %11 = arith.index_cast %10 : i32 to index
      %c0 = arith.constant 0 : index
      %12 = vector.load %arg2[%11, %c0] : memref<64x128xf32, #tpu.memory_space<vmem>>, vector<1x128xf32>
      %13 = arith.index_cast %7 : i32 to index
      %c0_4 = arith.constant 0 : index
      %14 = vector.load %arg3[%13, %c0_4] : memref<16x128xf32, #tpu.memory_space<vmem>>, vector<1x128xf32>
      tpu.vector_store %arg3[%13, %c0_4], %12 {strides = array<i32>} : memref<16x128xf32, #tpu.memory_space<vmem>>, vector<1x128xf32>,
      %c1_i32_5 = arith.constant 1 : i32
      %15 = arith.addi %6, %c1_i32_5 : i32
      %16 = arith.addi %1, %15 : i32
      %17 = arith.index_cast %16 : i32 to index
      %18 = memref.load %arg1[%17] : memref<16xi32, #tpu.memory_space<smem>>
      %19 = arith.index_cast %18 : i32 to index
      %c0_6 = arith.constant 0 : index
      %20 = vector.load %arg2[%19, %c0_6] : memref<64x128xf32, #tpu.memory_space<vmem>>, vector<1x128xf32>
      %21 = arith.index_cast %15 : i32 to index
      %c0_7 = arith.constant 0 : index
      %22 = vector.load %arg3[%21, %c0_7] : memref<16x128xf32, #tpu.memory_space<vmem>>, vector<1x128xf32>
      tpu.vector_store %arg3[%21, %c0_7], %20 {strides = array<i32>} : memref<16x128xf32, #tpu.memory_space<vmem>>, vector<1x128xf32>,
      %c2_i32_8 = arith.constant 2 : i32
      %23 = arith.addi %6, %c2_i32_8 : i32
      %24 = arith.addi %1, %23 : i32
      %25 = arith.index_cast %24 : i32 to index
      %26 = memref.load %arg1[%25] : memref<16xi32, #tpu.memory_space<smem>>
      %27 = arith.index_cast %26 : i32 to index
      %c0_9 = arith.constant 0 : index
      %28 = vector.load %arg2[%27, %c0_9] : memref<64x128xf32, #tpu.memory_space<vmem>>, vector<1x128xf32>
      %29 = arith.index_cast %23 : i32 to index
      %c0_10 = arith.constant 0 : index
      %30 = vector.load %arg3[%29, %c0_10] : memref<16x128xf32, #tpu.memory_space<vmem>>, vector<1x128xf32>
      tpu.vector_store %arg3[%29, %c0_10], %28 {strides = array<i32>} : memref<16x128xf32, #tpu.memory_space<vmem>>, vector<1x128xf32>,
      %c3_i32 = arith.constant 3 : i32
      %31 = arith.addi %6, %c3_i32 : i32
      %32 = arith.addi %1, %31 : i32
      %33 = arith.index_cast %32 : i32 to index
      %34 = memref.load %arg1[%33] : memref<16xi32, #tpu.memory_space<smem>>
      %35 = arith.index_cast %34 : i32 to index
      %c0_11 = arith.constant 0 : index
      %36 = vector.load %arg2[%35, %c0_11] : memref<64x128xf32, #tpu.memory_space<vmem>>, vector<1x128xf32>
      %37 = arith.index_cast %31 : i32 to index
      %c0_12 = arith.constant 0 : index
      %38 = vector.load %arg3[%37, %c0_12] : memref<16x128xf32, #tpu.memory_space<vmem>>, vector<1x128xf32>
      tpu.vector_store %arg3[%37, %c0_12], %36 {strides = array<i32>} : memref<16x128xf32, #tpu.memory_space<vmem>>, vector<1x128xf32>,
      %c4_i32 = arith.constant 4 : i32
      %39 = arith.addi %6, %c4_i32 : i32
      %40 = arith.addi %1, %39 : i32
      %41 = arith.index_cast %40 : i32 to index
      %42 = memref.load %arg1[%41] : memref<16xi32, #tpu.memory_space<smem>>
      %43 = arith.index_cast %42 : i32 to index
      %c0_13 = arith.constant 0 : index
      %44 = vector.load %arg2[%43, %c0_13] : memref<64x128xf32, #tpu.memory_space<vmem>>, vector<1x128xf32>
      %45 = arith.index_cast %39 : i32 to index
      %c0_14 = arith.constant 0 : index
      %46 = vector.load %arg3[%45, %c0_14] : memref<16x128xf32, #tpu.memory_space<vmem>>, vector<1x128xf32>
      tpu.vector_store %arg3[%45, %c0_14], %44 {strides = array<i32>} : memref<16x128xf32, #tpu.memory_space<vmem>>, vector<1x128xf32>,
      %c5_i32 = arith.constant 5 : i32
      %47 = arith.addi %6, %c5_i32 : i32
      %48 = arith.addi %1, %47 : i32
      %49 = arith.index_cast %48 : i32 to index
      %50 = memref.load %arg1[%49] : memref<16xi32, #tpu.memory_space<smem>>
      %51 = arith.index_cast %50 : i32 to index
      %c0_15 = arith.constant 0 : index
      %52 = vector.load %arg2[%51, %c0_15] : memref<64x128xf32, #tpu.memory_space<vmem>>, vector<1x128xf32>
      %53 = arith.index_cast %47 : i32 to index
      %c0_16 = arith.constant 0 : index
      %54 = vector.load %arg3[%53, %c0_16] : memref<16x128xf32, #tpu.memory_space<vmem>>, vector<1x128xf32>
      tpu.vector_store %arg3[%53, %c0_16], %52 {strides = array<i32>} : memref<16x128xf32, #tpu.memory_space<vmem>>, vector<1x128xf32>,
      %c6_i32 = arith.constant 6 : i32
      %55 = arith.addi %6, %c6_i32 : i32
      %56 = arith.addi %1, %55 : i32
      %57 = arith.index_cast %56 : i32 to index
      %58 = memref.load %arg1[%57] : memref<16xi32, #tpu.memory_space<smem>>
      %59 = arith.index_cast %58 : i32 to index
      %c0_17 = arith.constant 0 : index
      %60 = vector.load %arg2[%59, %c0_17] : memref<64x128xf32, #tpu.memory_space<vmem>>, vector<1x128xf32>
      %61 = arith.index_cast %55 : i32 to index
      %c0_18 = arith.constant 0 : index
      %62 = vector.load %arg3[%61, %c0_18] : memref<16x128xf32, #tpu.memory_space<vmem>>, vector<1x128xf32>
      tpu.vector_store %arg3[%61, %c0_18], %60 {strides = array<i32>} : memref<16x128xf32, #tpu.memory_space<vmem>>, vector<1x128xf32>,
      %c7_i32 = arith.constant 7 : i32
      %63 = arith.addi %6, %c7_i32 : i32
      %64 = arith.addi %1, %63 : i32
      %65 = arith.index_cast %64 : i32 to index
      %66 = memref.load %arg1[%65] : memref<16xi32, #tpu.memory_space<smem>>
      %67 = arith.index_cast %66 : i32 to index
      %c0_19 = arith.constant 0 : index
      %68 = vector.load %arg2[%67, %c0_19] : memref<64x128xf32, #tpu.memory_space<vmem>>, vector<1x128xf32>
      %69 = arith.index_cast %63 : i32 to index
      %c0_20 = arith.constant 0 : index
      %70 = vector.load %arg3[%69, %c0_20] : memref<16x128xf32, #tpu.memory_space<vmem>>, vector<1x128xf32>
      tpu.vector_store %arg3[%69, %c0_20], %68 {strides = array<i32>} : memref<16x128xf32, #tpu.memory_space<vmem>>, vector<1x128xf32>,
    }
    %c2_i32_0 = arith.constant 2 : i32
    return
  }
  func.func @transform_0(%arg0: i32, %arg1: memref<16xi32, #tpu.memory_space<smem>>) -> (i32, i32) {
    %c0_i32 = arith.constant 0 : i32
    %c0_i32_0 = arith.constant 0 : i32
    %c0_i32_1 = arith.constant 0 : i32
    return %c0_i32, %c0_i32_0 : i32, i32
  }
  func.func @transform_1(%arg0: i32, %arg1: memref<16xi32, #tpu.memory_space<smem>>) -> (i32, i32) {
    %c0_i32 = arith.constant 0 : i32
    %c0_i32_0 = arith.constant 0 : i32
    return %arg0, %c0_i32 : i32, i32
  }
}

</mosaic_0001>

<llo_original>
// kernel: tpu_custom_call.1
$region0: #{tpu_custom_call.1}
  #allocation0 [shape = 'u32[]', space=smem, size = 0x4, offset = 0x4, fixed_abs, tag = 'smem constant byte address 0x4 - core index']
  #allocation1 [shape = 'u32[72,128]{1,0:T(1,128)}', space=vmem, size = 0x9000, scoped, tag = 'internal scratch']
  #allocation2 [shape = 's32[1]{0}', space=sflag, size = 0x4, scoped, tag = 'scoped memory for tpu_custom_call.1']
  #allocation3 [shape = 'u8[512]{0}', space=smem, size = 0x200, scoped, tag = 'prefetched SMEM operand 0']
  %s0 = inlined_call_operand.hbm [shape: s32[16], index: 0, kind: input, shape index: {}]
  %s1 = inlined_call_operand.hbm [shape: f32[64,128], index: 1, kind: input, shape index: {}]
  %s2 = inlined_call_operand.hbm [shape: f32[16,128], index: 2, kind: output, shape index: {}]
  %s3 = sld [smem:[#allocation0]]
  $region25: #{tpu_custom_call.1} parent=0
    _
  %s5 = ssub.s32 1, %s3
  %s6 = scalar_select 0, %s5, %s3
  %s8 = sshll.u32 %s0, 4
  %s9 = int_to_ptr.hbm [resolvable:$true] %s8
  %11 = dma.hbm_to_smem %s9, 16, [#allocation3], [#allocation2]
  %13 = dma.done [#allocation2], 16
  %14 = sfence
  $region1: #{tpu_custom_call.1} parent=0
    #allocation4 [shape = 'u8[32768]{0}', space=vmem, size = 0x8000, scoped, tag = 'input window, operand 1, single buffered']
    #allocation5 [shape = 's32[1]{0}', space=sflag, size = 0x4, scoped, tag = 'scoped memory for tpu_custom_call.1']
    #allocation6 [shape = 's32[1]{0}', space=sflag, size = 0x4, scoped, tag = 'scoped memory for tpu_custom_call.1']
    #allocation7 [shape = 'u8[8192]{0}', space=vmem, size = 0x2000, scoped, tag = 'output window, operand 0, single buffered']
    %15 = vsyncpa [#allocation5], 0
    %16 = vsyncpa [#allocation6], 0
    // Predicated region
    $region2: #{tpu_custom_call.1} parent=1 // pred_check
      _
    $region3: #{tpu_custom_call.1} parent=1 // pred_check_branch
      %18 = sbr.rel (0) target = $region5
    $region4: #{tpu_custom_call.1} parent=1 // pred_region
      %20 = vsyncadd [#allocation5], 0
      %s21 = sshll.u32 %s1, 4
      %s22 = int_to_ptr.hbm [resolvable:$true] %s21
      %s23 = sshll.u32 [#allocation4], 4
      %s24 = int_to_ptr.vmem [resolvable:$true] %s23
      %29 = dma.hbm_to_vmem [thread:$0]  %s22, 1024, %s24, [#allocation5], 128, 128, 8
    $region5: #{tpu_custom_call.1} parent=1 // pred_fallthru
      _
    // Predicated region
    $region6: #{tpu_custom_call.1} parent=1 // pred_check
      _
    $region7: #{tpu_custom_call.1} parent=1 // pred_check_branch
      %31 = sbr.rel (0) target = $region9
    $region8: #{tpu_custom_call.1} parent=1 // pred_region
      %33 = dma.done [#allocation5], 1024
    $region9: #{tpu_custom_call.1} parent=1 // pred_fallthru
      _
    %s34 = smul.u32 0, 16
    loop: start=0, step=1, limit=2
    $region10: #{tpu_custom_call.1} parent=1 // loop_pre_header
      _
    $region11: #{tpu_custom_call.1} parent=1 // loop_header
      %s36 = sphi 0, %s40
      %p37 = scmp.ge.s32.totalorder %s36, 2
    $region12: #{tpu_custom_call.1} parent=1 // loop_header_branch
      %39 = sbr.rel (%p37) target = $region16
    $region13: #{tpu_custom_call.1} parent=1 // loop_body
      %s41 = smul.u32 %s36, 8
      %s42 = sadd.s32 %s34, %s41
      %s43 = sld [smem:[#allocation3 + %s42]]
      %s44 = scalar_lea.vmem [#allocation4], %s43
      %v45 = vld [vmem:[%s44] sm:$0x1]
      %s46 = scalar_lea.vmem [#allocation7], %s41
      %47 = vst [vmem:[%s46] sm:$0x1] %v45
      %s48 = sadd.s32 %s41, 1
      %s49 = sadd.s32 %s34, %s48
      %s50 = sld [smem:[#allocation3 + %s49]]
      %s51 = scalar_lea.vmem [#allocation4], %s50
      %v52 = vld [vmem:[%s51] sm:$0x1]
      %s53 = scalar_lea.vmem [#allocation7], %s48
      %54 = vst [vmem:[%s53] sm:$0x1] %v52
      %s55 = sadd.s32 %s41, 2
      %s56 = sadd.s32 %s34, %s55
      %s57 = sld [smem:[#allocation3 + %s56]]
      %s58 = scalar_lea.vmem [#allocation4], %s57
      %v59 = vld [vmem:[%s58] sm:$0x1]
      %s60 = scalar_lea.vmem [#allocation7], %s55
      %61 = vst [vmem:[%s60] sm:$0x1] %v59
      %s62 = sadd.s32 %s41, 3
      %s63 = sadd.s32 %s34, %s62
      %s64 = sld [smem:[#allocation3 + %s63]]
      %s65 = scalar_lea.vmem [#allocation4], %s64
      %v66 = vld [vmem:[%s65] sm:$0x1]
      %s67 = scalar_lea.vmem [#allocation7], %s62
      %68 = vst [vmem:[%s67] sm:$0x1] %v66
      %s69 = sadd.s32 %s41, 4
      %s70 = sadd.s32 %s34, %s69
      %s71 = sld [smem:[#allocation3 + %s70]]
      %s72 = scalar_lea.vmem [#allocation4], %s71
      %v73 = vld [vmem:[%s72] sm:$0x1]
      %s74 = scalar_lea.vmem [#allocation7], %s69
      %75 = vst [vmem:[%s74] sm:$0x1] %v73
      %s76 = sadd.s32 %s41, 5
      %s77 = sadd.s32 %s34, %s76
      %s78 = sld [smem:[#allocation3 + %s77]]
      %s79 = scalar_lea.vmem [#allocation4], %s78
      %v80 = vld [vmem:[%s79] sm:$0x1]
      %s81 = scalar_lea.vmem [#allocation7], %s76
      %82 = vst [vmem:[%s81] sm:$0x1] %v80
      %s83 = sadd.s32 %s41, 6
      %s84 = sadd.s32 %s34, %s83
      %s85 = sld [smem:[#allocation3 + %s84]]
      %s86 = scalar_lea.vmem [#allocation4], %s85
      %v87 = vld [vmem:[%s86] sm:$0x1]
      %s88 = scalar_lea.vmem [#allocation7], %s83
      %89 = vst [vmem:[%s88] sm:$0x1] %v87
      %s90 = sadd.s32 %s41, 7
      %s91 = sadd.s32 %s34, %s90
      %s92 = sld [smem:[#allocation3 + %s91]]
      %s93 = scalar_lea.vmem [#allocation4], %s92
      %v94 = vld [vmem:[%s93] sm:$0x1]
      %s95 = scalar_lea.vmem [#allocation7], %s90
      %96 = vst [vmem:[%s95] sm:$0x1] %v94
    $region14: #{tpu_custom_call.1} parent=1 // loop_footer
      %s40 = sadd.s32 1, %s36
    $region15: #{tpu_custom_call.1} parent=1 // loop_footer_branch
      %35 = sbr.rel target = $region11
    $region16: #{tpu_custom_call.1} parent=1 // loop_exit
      _
    // Predicated region
    $region17: #{tpu_custom_call.1} parent=1 // pred_check
      _
    $region18: #{tpu_custom_call.1} parent=1 // pred_check_branch
      %98 = sbr.rel (0) target = $region20
    $region19: #{tpu_custom_call.1} parent=1 // pred_region
      %100 = vsyncadd [#allocation6], 0
      %s101 = sshll.u32 [#allocation7], 4
      %s102 = int_to_ptr.vmem [resolvable:$true] %s101
      %s103 = sshll.u32 %s2, 4
      %s104 = int_to_ptr.hbm [resolvable:$true] %s103
      %109 = dma.vmem_to_hbm [thread:$0]  %s102, 256, %s104, [#allocation6], 128, 128, 8
    $region20: #{tpu_custom_call.1} parent=1 // pred_fallthru
      _
    // Predicated region
    $region21: #{tpu_custom_call.1} parent=1 // pred_check
      _
    $region22: #{tpu_custom_call.1} parent=1 // pred_check_branch
      %111 = sbr.rel (0) target = $region24
    $region23: #{tpu_custom_call.1} parent=1 // pred_region
      %113 = dma.done [#allocation6], 256
    $region24: #{tpu_custom_call.1} parent=1 // pred_fallthru
      _
    %114 = vsyncpa [#allocation5], 1
    %115 = vsyncpa [#allocation6], 1

</llo_original>
